<compile_context>
chip_gen: v7x
topology: tpu7x:2x2x1
jax: 0.10.0
libtpu: 0.0.40
codegen_flags: <defaults>
</compile_context>

<pallas_src>
import functools

import jax
import jax.numpy as jnp
from jax import lax
from jax.experimental import pallas as pl
from jax.experimental.pallas import tpu as pltpu


def _decoder_kernel(norm_ref, mask_ref, w_ref, out_main_ref, out_tail_ref,
                    carry_ref, *, stride):
    # norm_ref:     SMEM f32[B']            per (batch*speaker) norm coefficient
    # mask_ref:     VMEM (TB, N, TK)        NCW mask tile (no wrapper transpose)
    # w_ref:        VMEM (N, Lp)            ConvTranspose1d weight, Lp = R*stride >= L
    # out_main_ref: VMEM (TB, stride, TK)   lane-dense output tile (time rows on lanes)
    # out_tail_ref: VMEM (TB, stride, R-1)  final R-1 overlap rows (block idx const in K)
    # carry_ref:    VMEM (TB, stride, R-1)  overlap-add tail carried across K tiles
    TB, _, TK = mask_ref.shape
    Lp = w_ref.shape[1]
    s = stride
    R = Lp // s

    kq = pl.program_id(1)
    base = pl.program_id(0) * TB

    @pl.when(kq == 0)
    def _():
        carry_ref[...] = jnp.zeros_like(carry_ref)

    w = w_ref[...]                                         # [N, Lp]

    def per_row(t, c):
        x = mask_ref[t]                                    # [N, TK]
        # Contract over N with K on the MXU's wide (lane) free dim:
        #   frames[l, k] = sum_n w[n, l] * x[n, k]  ->  [Lp, TK], f32 accumulation.
        frames = lax.dot_general(
            w, x, dimension_numbers=(((0,), (0,)), ((), ())),
            preferred_element_type=jnp.float32)

        # Lane-major overlap-add: chunk j = frames[j*s:(j+1)*s, :] (sublane-aligned
        # slice when stride % 8 == 0) lands at lane offset j.  Start the accumulator
        # with the tail carried from the previous K tile (lanes [0, R-1)).
        carry = carry_ref[t]                               # [s, R-1]
        acc = jnp.concatenate(
            [carry, jnp.zeros((s, TK), jnp.float32)], axis=1)   # [s, TK+R-1]
        for j in range(R):                                 # R is small & static
            chunk = frames[j * s:(j + 1) * s, :]           # [s, TK]
            parts = []
            if j:
                parts.append(jnp.zeros((s, j), jnp.float32))
            parts.append(chunk)
            if R - 1 - j:
                parts.append(jnp.zeros((s, R - 1 - j), jnp.float32))
            shifted = parts[0] if len(parts) == 1 else jnp.concatenate(parts, axis=1)
            acc = acc + shifted
        # TODO(synk): move the shifted adds onto the (otherwise idle) XLU slot with
        # pltpu.roll on a lane-padded frames buffer.

        coef = norm_ref[base + t]
        out_main_ref[t] = (acc[:, :TK] * coef).astype(out_main_ref.dtype)
        new_tail = acc[:, TK:]                             # [s, R-1]
        carry_ref[t] = new_tail                            # un-scaled carry
        # Re-written every K step; only the last step's value reaches HBM.
        out_tail_ref[t] = (new_tail * coef).astype(out_tail_ref.dtype)
        return c

    lax.fori_loop(0, TB, per_row, 0)


def _vmem_capacity_bytes(default=64 << 20):
    try:
        cap = getattr(pltpu.get_tpu_info(), "vmem_capacity_bytes", None)
        if cap:
            return int(cap)
    except Exception:
        pass
    return default


def _choose_tiles(Bp, N, K, stride, R, in_itemsize, budget_bytes,
                  block_k=None, block_rows=None):
    """Pick (TB, TK) from a VMEM budget.

    TB keeps >= 2 steps on the 'parallel' axis when Bp > 1 (both v7x TCs get
    work); block fattening comes from TK (biggest divisor of K that fits and
    satisfies the Mosaic lane rule: TK % 128 == 0 or TK == K).
    """
    if block_rows is not None:
        TB = block_rows
    elif Bp == 1:
        TB = 1
    else:
        TB = 1
        for cand in range(2, min(Bp // 2, 8) + 1):
            if Bp % cand == 0:
                TB = cand
    assert Bp % TB == 0

    if block_k is not None:
        TK = block_k
    else:
        def step_bytes(tk):
            mask_b = TB * N * tk * in_itemsize
            out_b = TB * stride * tk * 4
            return 2 * (mask_b + out_b)          # double-buffered input + output blocks
        cands = [d for d in range(1, K + 1)
                 if K % d == 0 and (d % 128 == 0 or d == K)
                 and step_bytes(d) <= budget_bytes]
        if cands:
            TK = max(cands)
        else:
            big = [d for d in range(1, K + 1) if K % d == 0 and d % 128 == 0]
            TK = max(big) if big else K
            # TODO(synk): handle ragged K (no usable divisor) by masking the padded
            # frames of a final partial tile instead of requiring K % TK == 0.
    assert K % TK == 0 and (TK % 128 == 0 or TK == K)
    return TB, TK


def decoder_forward(mixture_weights, mask, norm_coef, weight, *,
                    N, L, stride, num_spk, compute_dtype=jnp.float32,
                    block_k=None, block_rows=None):
    """weight: [N, L] (= ConvTranspose1d weight [N, 1, L] with out channel squeezed).

    compute_dtype=jnp.bfloat16 halves the dominant mask HBM read (f32 MXU
    accumulation is kept), but only pays off if the cast fuses into the mask's
    producer (or the mask already arrives in bf16); expect ~1e-2 rel. error.
    """
    del mixture_weights                           # unused by the PyTorch forward too
    B = mask.shape[0]
    K = mask.shape[2]
    Bp = B * num_spk
    T = (K - 1) * stride + L

    R = max(2, -(-L // stride))                   # >= 2 so the tail output is non-empty
    Lp = R * stride
    rows = K + R - 1

    # Glue (no HBM transpose): [B, num_spk*N, K] -> [B*num_spk, N, K] is a free view.
    mask_rows = mask.reshape(Bp, N, K)
    if mask_rows.dtype != compute_dtype:
        mask_rows = mask_rows.astype(compute_dtype)
    w = weight.astype(compute_dtype)
    if Lp != L:                                   # pad L up to a multiple of stride
        w = jnp.pad(w, ((0, 0), (0, Lp - L)))
    # One norm coefficient per (batch, speaker) row, scalar-prefetched into SMEM.
    # (Assumes norm_coef is [B, 1, 1] as in the PyTorch module.)
    norm_flat = jnp.repeat(norm_coef.reshape(B).astype(jnp.float32), num_spk)

    vmem_cap = _vmem_capacity_bytes()             # 64 MiB (v7x) / 128 MiB (v5e/v6e)
    vmem_limit = int(0.75 * vmem_cap)             # ~48 MiB v7x, ~96 MiB v5e/v6e
    TB, TK = _choose_tiles(Bp, N, K, stride, R,
                           jnp.dtype(compute_dtype).itemsize,
                           budget_bytes=vmem_limit // 2,
                           block_k=block_k, block_rows=block_rows)

    kernel = functools.partial(_decoder_kernel, stride=stride)

    out_main, out_tail = pl.pallas_call(
        kernel,
        out_shape=(jax.ShapeDtypeStruct((Bp, stride, K), jnp.float32),
                   jax.ShapeDtypeStruct((Bp, stride, R - 1), jnp.float32)),
        grid_spec=pltpu.PrefetchScalarGridSpec(
            num_scalar_prefetch=1,
            grid=(Bp // TB, K // TK),
            in_specs=[
                # TODO(synk): pipeline_mode=pl.Buffered(3) on the mask spec for v7x
                # if small K tiles expose DMA latency against 3.2 TB/s HBM.
                pl.BlockSpec((TB, N, TK), lambda b, kq, norm: (b, 0, kq)),
                pl.BlockSpec((N, Lp), lambda b, kq, norm: (0, 0)),
            ],
            out_specs=[
                pl.BlockSpec((TB, stride, TK), lambda b, kq, norm: (b, 0, kq)),
                pl.BlockSpec((TB, stride, R - 1), lambda b, kq, norm: (b, 0, 0)),
            ],
            scratch_shapes=[pltpu.VMEM((TB, stride, R - 1), jnp.float32)],
        ),
        compiler_params=pltpu.CompilerParams(
            dimension_semantics=("parallel", "arbitrary"),
            vmem_limit_bytes=vmem_limit),
    )(norm_flat, mask_rows, w)

    # [Bp, s, K] ++ [Bp, s, R-1] -> [Bp, rows, s] -> [Bp, T]; the transpose runs on
    # the output (N/stride times smaller than the mask), not inside the kernel.
    full = jnp.concatenate([out_main, out_tail], axis=2)          # [Bp, s, rows]
    out = jnp.transpose(full, (0, 2, 1)).reshape(Bp, rows * stride)
    out = out[:, :T]
    return out.reshape(B, num_spk, T)


def decoder_reference(mask, norm_coef, weight, *, N, L, stride, num_spk):
    """Plain-JAX reference of ConvTranspose1d(N, 1, L, stride, bias=False)."""
    B, _, K = mask.shape
    Bp = B * num_spk
    T = (K - 1) * stride + L
    x = mask.reshape(Bp, N, K)
    frames = jnp.einsum('bnk,nl->bkl', x, weight)     # [B', K, L]
    out = jnp.zeros((Bp, T), jnp.float32)
    for k in range(K):
        out = out.at[:, k * stride:k * stride + L].add(frames[:, k, :])
    return out.reshape(B, num_spk, T) * norm_coef


def _run_case(key, B, N, K, L, stride, num_spk, block_k=None):
    k1, k2, k3, k4 = jax.random.split(key, 4)
    mixture_weights = jax.random.normal(k1, (B, N, K), jnp.float32)   # unused
    mask = jax.random.normal(k2, (B, num_spk * N, K), jnp.float32)
    norm_coef = jax.random.uniform(k3, (B, 1, 1), jnp.float32, 0.5, 1.5)
    weight = jax.random.normal(k4, (N, L), jnp.float32) * 0.1         # [N, 1, L] squeezed

    out = decoder_forward(mixture_weights, mask, norm_coef, weight,
                          N=N, L=L, stride=stride, num_spk=num_spk,
                          block_k=block_k)
    out = jax.block_until_ready(out)

    ref = decoder_reference(mask, norm_coef, weight,
                            N=N, L=L, stride=stride, num_spk=num_spk)
    T = (K - 1) * stride + L
    assert out.shape == (B, num_spk, T), out.shape
    err = jnp.max(jnp.abs(out - ref))
    assert jnp.allclose(out, ref, atol=1e-4, rtol=1e-4), f"max err {err}"


if __name__ == "__main__":
    key = jax.random.PRNGKey(0)
    k_a, k_b = jax.random.split(key)
    # Small, module-consistent shapes (single K tile).
    _run_case(k_a, B=2, N=32, K=8, L=16, stride=8, num_spk=2)
    # Exercise the K-tiling / overlap-carry path (2 K tiles of 128 frames).
    _run_case(k_b, B=2, N=32, K=256, L=16, stride=8, num_spk=2, block_k=128)
    print("KERNEL_OK")
</pallas_src>

<mosaic_0001>
module attributes {stable_mosaic.version = 11 : i64} {
  func.func @_decoder_kernel(%arg0: i32, %arg1: i32, %arg2: memref<4xf32, #tpu.memory_space<smem>>, %arg3: memref<2x32x8xf32, #tpu.memory_space<vmem>>, %arg4: memref<32x16xf32, #tpu.memory_space<vmem>>, %arg5: memref<2x8x8xf32, #tpu.memory_space<vmem>>, %arg6: memref<2x8x1xf32, #tpu.memory_space<vmem>>, %arg7: memref<2x8x1xf32, #tpu.memory_space<vmem>>) attributes {dimension_semantics = [#tpu.dimension_semantics<parallel>, #tpu.dimension_semantics<arbitrary>], iteration_bounds = array<i64: 2, 1>, scalar_prefetch = 1 : i64, scratch_operands = 1 : i64, tpu.core_type = #tpu.core_type<tc>, window_params = [{transform_indices = @transform_0, window_bounds = array<i64: 2, 32, 8>}, {pipeline_mode = #tpu.pipeline_mode<synchronous>, transform_indices = @transform_1, window_bounds = array<i64: 32, 16>}, {transform_indices = @transform_2, window_bounds = array<i64: 2, 8, 8>}, {transform_indices = @transform_3, window_bounds = array<i64: 2, 8, 1>}]} {
    %c2_i32 = arith.constant 2 : i32
    %0 = arith.muli %arg0, %c2_i32 : i32
    %c0_i32 = arith.constant 0 : i32
    %1 = arith.cmpi eq, %arg1, %c0_i32 : i32
    %2 = arith.extui %1 : i1 to i32
    %c0_i32_0 = arith.constant 0 : i32
    %3 = arith.cmpi ne, %2, %c0_i32_0 : i32
    scf.if %3 {
      %cst = arith.constant 0.000000e+00 : f32
      %6 = vector.broadcast %cst : f32 to vector<2x8x1xf32>
      %c0_5 = arith.constant 0 : index
      %c0_6 = arith.constant 0 : index
      %c0_7 = arith.constant 0 : index
      %7 = vector.load %arg7[%c0_5, %c0_6, %c0_7] : memref<2x8x1xf32, #tpu.memory_space<vmem>>, vector<2x8x1xf32>
      tpu.vector_store %arg7[%c0_5, %c0_6, %c0_7], %6 {strides = array<i32>} : memref<2x8x1xf32, #tpu.memory_space<vmem>>, vector<2x8x1xf32>,
    } else {
    }
    %c0 = arith.constant 0 : index
    %c0_1 = arith.constant 0 : index
    %4 = vector.load %arg4[%c0, %c0_1] : memref<32x16xf32, #tpu.memory_space<vmem>>, vector<32x16xf32>
    %c0_i32_2 = arith.constant 0 : i32
    %c2_i32_3 = arith.constant 2 : i32
    %5 = arith.addi %c0_i32_2, %c2_i32_3 : i32
    %c1_i32 = arith.constant 1 : i32
    scf.for %arg8 = %c0_i32_2 to %5 step %c1_i32  : i32 {
      %6 = arith.index_cast %arg8 : i32 to index
      %c0_5 = arith.constant 0 : index
      %c0_6 = arith.constant 0 : index
      %7 = vector.load %arg3[%6, %c0_5, %c0_6] : memref<2x32x8xf32, #tpu.memory_space<vmem>>, vector<1x32x8xf32>
      %8 = vector.shape_cast %7 : vector<1x32x8xf32> to vector<32x8xf32>
      %cst = arith.constant dense<0.000000e+00> : vector<16x8xf32>
      %9 = tpu.matmul %4, %8, %cst {dimension_numbers = #tpu.dot_dimension_numbers<[0], [0], [1], [1], [0, 1, 1, 1], [], []>} : vector<32x16xf32>, vector<32x8xf32>, vector<16x8xf32> -> vector<16x8xf32>
      %10 = arith.index_cast %arg8 : i32 to index
      %c0_7 = arith.constant 0 : index
      %c0_8 = arith.constant 0 : index
      %11 = vector.load %arg7[%10, %c0_7, %c0_8] : memref<2x8x1xf32, #tpu.memory_space<vmem>>, vector<1x8x1xf32>
      %12 = vector.shape_cast %11 : vector<1x8x1xf32> to vector<8x1xf32>
      %cst_9 = arith.constant 0.000000e+00 : f32
      %13 = vector.broadcast %cst_9 : f32 to vector<8x8xf32>
      %14 = tpu.concatenate %12, %13 in 1 : vector<8x1xf32>, vector<8x8xf32> -> vector<8x9xf32>
      %15 = vector.extract_strided_slice %9 {offsets = [0, 0], sizes = [8, 8], strides = [1, 1]} : vector<16x8xf32> to vector<8x8xf32>
      %cst_10 = arith.constant 0.000000e+00 : f32
      %16 = vector.broadcast %cst_10 : f32 to vector<8x1xf32>
      %17 = tpu.concatenate %15, %16 in 1 : vector<8x8xf32>, vector<8x1xf32> -> vector<8x9xf32>
      %18 = arith.addf %14, %17 : vector<8x9xf32>
      %19 = vector.extract_strided_slice %9 {offsets = [8, 0], sizes = [8, 8], strides = [1, 1]} : vector<16x8xf32> to vector<8x8xf32>
      %cst_11 = arith.constant 0.000000e+00 : f32
      %20 = vector.broadcast %cst_11 : f32 to vector<8x1xf32>
      %21 = tpu.concatenate %20, %19 in 1 : vector<8x1xf32>, vector<8x8xf32> -> vector<8x9xf32>
      %22 = arith.addf %18, %21 : vector<8x9xf32>
      %23 = arith.addi %0, %arg8 : i32
      %24 = arith.index_cast %23 : i32 to index
      %25 = memref.load %arg2[%24] : memref<4xf32, #tpu.memory_space<smem>>
      %26 = vector.extract_strided_slice %22 {offsets = [0, 0], sizes = [8, 8], strides = [1, 1]} : vector<8x9xf32> to vector<8x8xf32>
      %27 = vector.broadcast %25 : f32 to vector<8x8xf32>
      %28 = arith.mulf %26, %27 : vector<8x8xf32>
      %29 = arith.index_cast %arg8 : i32 to index
      %c0_12 = arith.constant 0 : index
      %c0_13 = arith.constant 0 : index
      %30 = vector.load %arg5[%29, %c0_12, %c0_13] : memref<2x8x8xf32, #tpu.memory_space<vmem>>, vector<1x8x8xf32>
      %31 = vector.shape_cast %30 : vector<1x8x8xf32> to vector<8x8xf32>
      %32 = vector.shape_cast %28 : vector<8x8xf32> to vector<1x8x8xf32>
      tpu.vector_store %arg5[%29, %c0_12, %c0_13], %32 {strides = array<i32>} : memref<2x8x8xf32, #tpu.memory_space<vmem>>, vector<1x8x8xf32>,
      %33 = vector.extract_strided_slice %22 {offsets = [0, 8], sizes = [8, 1], strides = [1, 1]} : vector<8x9xf32> to vector<8x1xf32>
      %34 = arith.index_cast %arg8 : i32 to index
      %c0_14 = arith.constant 0 : index
      %c0_15 = arith.constant 0 : index
      %35 = vector.load %arg7[%34, %c0_14, %c0_15] : memref<2x8x1xf32, #tpu.memory_space<vmem>>, vector<1x8x1xf32>
      %36 = vector.shape_cast %35 : vector<1x8x1xf32> to vector<8x1xf32>
      %37 = vector.shape_cast %33 : vector<8x1xf32> to vector<1x8x1xf32>
      tpu.vector_store %arg7[%34, %c0_14, %c0_15], %37 {strides = array<i32>} : memref<2x8x1xf32, #tpu.memory_space<vmem>>, vector<1x8x1xf32>,
      %38 = vector.broadcast %25 : f32 to vector<8x1xf32>
      %39 = arith.mulf %33, %38 : vector<8x1xf32>
      %40 = arith.index_cast %arg8 : i32 to index
      %c0_16 = arith.constant 0 : index
      %c0_17 = arith.constant 0 : index
      %41 = vector.load %arg6[%40, %c0_16, %c0_17] : memref<2x8x1xf32, #tpu.memory_space<vmem>>, vector<1x8x1xf32>
      %42 = vector.shape_cast %41 : vector<1x8x1xf32> to vector<8x1xf32>
      %43 = vector.shape_cast %39 : vector<8x1xf32> to vector<1x8x1xf32>
      tpu.vector_store %arg6[%40, %c0_16, %c0_17], %43 {strides = array<i32>} : memref<2x8x1xf32, #tpu.memory_space<vmem>>, vector<1x8x1xf32>,
    }
    %c2_i32_4 = arith.constant 2 : i32
    return
  }
  func.func @transform_0(%arg0: i32, %arg1: i32, %arg2: memref<4xf32, #tpu.memory_space<smem>>) -> (i32, i32, i32) {
    %c0_i32 = arith.constant 0 : i32
    %c0_i32_0 = arith.constant 0 : i32
    return %arg0, %c0_i32, %arg1 : i32, i32, i32
  }
  func.func @transform_1(%arg0: i32, %arg1: i32, %arg2: memref<4xf32, #tpu.memory_space<smem>>) -> (i32, i32) {
    %c0_i32 = arith.constant 0 : i32
    %c0_i32_0 = arith.constant 0 : i32
    %c0_i32_1 = arith.constant 0 : i32
    return %c0_i32, %c0_i32_0 : i32, i32
  }
  func.func @transform_2(%arg0: i32, %arg1: i32, %arg2: memref<4xf32, #tpu.memory_space<smem>>) -> (i32, i32, i32) {
    %c0_i32 = arith.constant 0 : i32
    %c0_i32_0 = arith.constant 0 : i32
    return %arg0, %c0_i32, %arg1 : i32, i32, i32
  }
  func.func @transform_3(%arg0: i32, %arg1: i32, %arg2: memref<4xf32, #tpu.memory_space<smem>>) -> (i32, i32, i32) {
    %c0_i32 = arith.constant 0 : i32
    %c0_i32_0 = arith.constant 0 : i32
    %c0_i32_1 = arith.constant 0 : i32
    return %arg0, %c0_i32, %c0_i32_0 : i32, i32, i32
  }
}

</mosaic_0001>

<llo_original>
// kernel: tpu_custom_call.1
$region0: #{tpu_custom_call.1}
  #allocation0 [shape = 'u32[]', space=smem, size = 0x4, offset = 0x4, fixed_abs, tag = 'smem constant byte address 0x4 - core index']
  #allocation1 [shape = 'u32[144,128]{1,0:T(1,128)}', space=vmem, size = 0x12000, scoped, tag = 'internal scratch']
  #allocation2 [shape = 'f32[2,8,1]{2,1,0:T(8,128)}', space=vmem, size = 0x2000, scoped, tag = 'scratch operand']
  #allocation3 [shape = 's32[1]{0}', space=sflag, size = 0x4, scoped, tag = 'scoped memory for tpu_custom_call.1']
  #allocation4 [shape = 'u8[512]{0}', space=smem, size = 0x200, scoped, tag = 'prefetched SMEM operand 0']
  %s0 = inlined_call_operand.vmem [shape: f32[4], index: 0, kind: input, shape index: {}]
  %s1 = inlined_call_operand.vmem [shape: f32[4,32,8], index: 1, kind: input, shape index: {}]
  %s2 = inlined_call_operand.vmem [shape: f32[32,16], index: 2, kind: input, shape index: {}]
  %s3 = inlined_call_operand.hbm [shape: f32[4,8,8], index: 3, kind: output, shape index: {0}]
  %s4 = inlined_call_operand.vmem [shape: f32[4,8,1], index: 4, kind: output, shape index: {1}]
  %5 = xla_tuple %s3, %s4
  %s6 = sld [smem:[#allocation0]]
  $region60: #{tpu_custom_call.1} parent=0
    _
  %s8 = ssub.s32 1, %s6
  %s9 = scalar_select 0, %s8, %s6
  %s10 = sshll.u32 %s0, 4
  %s11 = int_to_ptr.vmem [resolvable:$true] %s10
  %13 = dma.vmem_to_smem %s11, 16, [#allocation4], [#allocation3]
  %14 = dma.done [#allocation3], 16
  %15 = sfence
  $region1: #{tpu_custom_call.1} parent=0
    #allocation5 [shape = 'u8[16384]{0}', space=vmem, size = 0x4000, scoped, tag = 'output window, operand 0']
    #allocation6 [shape = 's32[2]{0}', space=sflag, size = 0x8, scoped, tag = 'scoped memory for tpu_custom_call.1']
    %16 = vsyncpa [#allocation6], 0
    %s17 = scalar_lea.sflag [#allocation6], 1
    %18 = vsyncpa %s17, 0
    loop: start=0, step=1, limit=4
    $region2: #{tpu_custom_call.1} parent=1 // loop_pre_header
      _
    $region3: #{tpu_custom_call.1} parent=1 // loop_header
      %s20 = sphi 0, %s24
      %p21 = scmp.ge.s32.totalorder %s20, 4
      %s27 = sphi 0, %s39
      %s28 = sphi 0, %s35
      %s29 = sphi 0, %s27
      %s30 = sphi 0, %s28
      %s31 = sphi 0, %s29
      %s32 = sphi 0, %s30
      %s44 = sphi 0, %s46
      %s47 = sphi 0, %s44
      %s48 = sphi 0, %s47
      %s64 = sphi 0, %s48
      %s68 = sphi 0, %s68
      %s70 = sphi 0, %s68
      %s71 = sphi 0, %s70
      %s85 = sphi 0, %s71
      %s93 = sphi 0, %s95
      %s96 = sphi 0, %s93
      %s97 = sphi 0, %s96
      %s113 = sphi 0, %s97
      %s119 = sphi 0, %s121
      %s122 = sphi 0, %s119
      %s123 = sphi 0, %s122
      %s139 = sphi 0, %s123
    $region4: #{tpu_custom_call.1} parent=1 // loop_header_branch
      %23 = sbr.rel (%p21) target = $region8
    $region5: #{tpu_custom_call.1} parent=1 // loop_body
      %s25 = ssub.s32 %s20, 1
      %s26 = ssub.s32 %s20, 2
      %s33 = sadd.s32 1, %s28
      %p34 = scmp.ge.s32.totalorder %s33, 1
      %s35 = scalar_select %p34, 0, %s33
      %s36 = sadd.s32 1, %s27
      %s37 = scalar_select %p34, %s36, %s27
      %p38 = scmp.ge.s32.totalorder %s37, 2
      %s39 = scalar_select %p38, 0, %s37
      %s40 = ssub.s32 %s27, %s39
      %s41 = ssub.s32 %s28, %s35
      %s42 = sor.u32 %s40, %s41
      %p43 = scmp.eq.s32.totalorder %s42, 0
      %s45 = sadd.s32 %s44, 1
      %s46 = scalar_select %p43, %s44, %s45
      %p49 = pneg %p43
      %p50 = scmp.eq.s32.totalorder %s20, 1
      %p51 = por %p49, %p50
      %p52 = scmp.ne.s32.totalorder %s44, %s47
      %p53 = scmp.eq.s32.totalorder %s20, 0
      %p54 = por %p52, %p53
      %p55 = scmp.ne.s32.totalorder %s44, %s47
      %p56 = scmp.eq.s32.totalorder %s25, 1
      %p57 = por %p55, %p56
      %p58 = scmp.ne.s32.totalorder %s47, %s48
      %p59 = scmp.eq.s32.totalorder %s25, 0
      %p60 = por %p58, %p59
      %p61 = scmp.ne.s32.totalorder %s47, %s48
      %p62 = scmp.eq.s32.totalorder %s26, 1
      %p63 = por %p61, %p62
      %p65 = scmp.ne.s32.totalorder %s48, %s64
      %p66 = scmp.eq.s32.totalorder %s26, 0
      %p67 = por %p65, %p66
      %s69 = sadd.s32 %s68, 1
      %p72 = scmp.eq.s32.totalorder %s20, 1
      %p73 = scmp.ne.s32.totalorder %s68, %s70
      %p74 = scmp.eq.s32.totalorder %s20, 0
      %p75 = por %p73, %p74
      %p76 = scmp.ne.s32.totalorder %s68, %s70
      %p77 = scmp.eq.s32.totalorder %s25, 1
      %p78 = por %p76, %p77
      %p79 = scmp.ne.s32.totalorder %s70, %s71
      %p80 = scmp.eq.s32.totalorder %s25, 0
      %p81 = por %p79, %p80
      %p82 = scmp.ne.s32.totalorder %s70, %s71
      %p83 = scmp.eq.s32.totalorder %s26, 1
      %p84 = por %p82, %p83
      %p86 = scmp.ne.s32.totalorder %s71, %s85
      %p87 = scmp.eq.s32.totalorder %s26, 0
      %p88 = por %p86, %p87
      %s89 = ssub.s32 %s27, %s39
      %s90 = ssub.s32 %s28, %s35
      %s91 = sor.u32 %s89, %s90
      %p92 = scmp.eq.s32.totalorder %s91, 0
      %s94 = sadd.s32 %s93, 1
      %s95 = scalar_select %p92, %s93, %s94
      %p98 = pneg %p92
      %p99 = scmp.eq.s32.totalorder %s20, 1
      %p100 = por %p98, %p99
      %p101 = scmp.ne.s32.totalorder %s93, %s96
      %p102 = scmp.eq.s32.totalorder %s20, 0
      %p103 = por %p101, %p102
      %p104 = scmp.ne.s32.totalorder %s93, %s96
      %p105 = scmp.eq.s32.totalorder %s25, 1
      %p106 = por %p104, %p105
      %p107 = scmp.ne.s32.totalorder %s96, %s97
      %p108 = scmp.eq.s32.totalorder %s25, 0
      %p109 = por %p107, %p108
      %p110 = scmp.ne.s32.totalorder %s96, %s97
      %p111 = scmp.eq.s32.totalorder %s26, 1
      %p112 = por %p110, %p111
      %p114 = scmp.ne.s32.totalorder %s97, %s113
      %p115 = scmp.eq.s32.totalorder %s26, 0
      %p116 = por %p114, %p115
      %s117 = ssub.s32 %s27, %s39
      %p118 = scmp.eq.s32.totalorder %s117, 0
      %s120 = sadd.s32 %s119, 1
      %s121 = scalar_select %p118, %s119, %s120
      %p124 = pneg %p118
      %p125 = scmp.eq.s32.totalorder %s20, 1
      %p126 = por %p124, %p125
      %p127 = scmp.ne.s32.totalorder %s119, %s122
      %p128 = scmp.eq.s32.totalorder %s20, 0
      %p129 = por %p127, %p128
      %p130 = scmp.ne.s32.totalorder %s119, %s122
      %p131 = scmp.eq.s32.totalorder %s25, 1
      %p132 = por %p130, %p131
      %p133 = scmp.ne.s32.totalorder %s122, %s123
      %p134 = scmp.eq.s32.totalorder %s25, 0
      %p135 = por %p133, %p134
      %p136 = scmp.ne.s32.totalorder %s122, %s123
      %p137 = scmp.eq.s32.totalorder %s26, 1
      %p138 = por %p136, %p137
      %p140 = scmp.ne.s32.totalorder %s123, %s139
      %p141 = scmp.eq.s32.totalorder %s26, 0
      %p142 = por %p140, %p141
      %p143 = scmp.le.s32.totalorder 1, %s20
      %p144 = scmp.lt.s32.totalorder %s20, 3
      %p145 = pnand %p143, %p144
      %p146 = pneg %p145
      // Predicated region
      $region9: #{tpu_custom_call.1} parent=5 // pred_check
        _
      $region10: #{tpu_custom_call.1} parent=5 // pred_check_branch
        %148 = sbr.rel (%p145) target = $region12
      $region11: #{tpu_custom_call.1} parent=5 // pred_region
        %s149 = ssub.s32 %s20, 1
        // Predicated region
        $region13: #{tpu_custom_call.1} parent=11 // pred_check
          %p150 = pneg %p81
        $region14: #{tpu_custom_call.1} parent=11 // pred_check_branch
          %152 = sbr.rel (%p150) target = $region16
        $region15: #{tpu_custom_call.1} parent=11 // pred_region
          _
        $region16: #{tpu_custom_call.1} parent=11 // pred_fallthru
          _
      $region12: #{tpu_custom_call.1} parent=5 // pred_fallthru
        _
      %p153 = scmp.lt.s32.totalorder %s20, 2
      // Predicated region
      $region17: #{tpu_custom_call.1} parent=5 // pred_check
        %p154 = pneg %p153
      $region18: #{tpu_custom_call.1} parent=5 // pred_check_branch
        %156 = sbr.rel (%p154) target = $region20
      $region19: #{tpu_custom_call.1} parent=5 // pred_region
        // Predicated region
        $region21: #{tpu_custom_call.1} parent=19 // pred_check
          %p157 = pneg %p54
        $region22: #{tpu_custom_call.1} parent=19 // pred_check_branch
          %159 = sbr.rel (%p157) target = $region24
        $region23: #{tpu_custom_call.1} parent=19 // pred_region
          %s160 = smul.u32 2, %s27
          %p161 = scmp.lt.s32.totalorder %s160, 3
          %s162 = scalar_select %p161, %s160, 3
          %p163 = scmp.lt.s32.totalorder %s28, 0
          %s164 = scalar_select %p163, %s28, 0
          %s165 = smul.addr %s162, 4
          %s166 = sadd.s32 %s164, %s165
          %s167 = smul.addr %s166, 8
          %s168 = scalar_lea.vmem %s1, %s167
          %s169 = smul.u32 2, %s27
        $region24: #{tpu_custom_call.1} parent=19 // pred_fallthru
          _
      $region20: #{tpu_custom_call.1} parent=5 // pred_fallthru
        _
      %p170 = scmp.le.s32.totalorder 1, %s20
      %p171 = scmp.lt.s32.totalorder %s20, 3
      %p172 = pnand %p170, %p171
      %p173 = pneg %p172
      // Predicated region
      $region25: #{tpu_custom_call.1} parent=5 // pred_check
        _
      $region26: #{tpu_custom_call.1} parent=5 // pred_check_branch
        %175 = sbr.rel (%p172) target = $region28
      $region27: #{tpu_custom_call.1} parent=5 // pred_region
        %s176 = ssub.s32 %s20, 1
        %s177 = smul.u32 2, %s29
        %p178 = scmp.lt.s32.totalorder %s177, 3
        %s179 = scalar_select %p178, %s177, 3
        %p180 = scmp.lt.s32.totalorder %s30, 0
        %s181 = scalar_select %p180, %s30, 0
        %s182 = smul.addr %s179, 4
        %s183 = sadd.s32 %s181, %s182
        %s184 = smul.addr %s183, 8
        %s185 = scalar_lea.vmem %s1, %s184
        %p186 = pneg %p60
        %p187 = pneg %p57
        %p188 = pneg %p81
        %p189 = pneg %p78
        %p190 = pneg %p109
        %p191 = pneg %p106
        %s192 = sand.u32 %s96, 1
        %s193 = scalar_lea.sflag [#allocation6], %s192
        %s194 = sand.u32 %s96, 1
        %s195 = smul.addr %s194, 16
        %s196 = scalar_lea.vmem [#allocation5], %s195
        %p197 = pneg %p135
        %p198 = pneg %p132
        %s199 = smul.u32 2, %s29
        %p200 = scmp.lt.s32.totalorder %s199, 3
        %s201 = scalar_select %p200, %s199, 3
        %s202 = smul.addr %s201, 8
        %s203 = scalar_lea.vmem %s4, %s202
        %s204 = smul.u32 2, %s29
        %p205 = scmp.lt.s32.totalorder %s204, 3
        %s206 = scalar_select %p205, %s204, 3
        %p207 = scmp.lt.s32.totalorder %s30, 0
        %s208 = scalar_select %p207, %s30, 0
        %s209 = smul.addr %s206, 4
        %s210 = sadd.s32 %s208, %s209
        %s211 = smul.addr %s210, 8
        %s212 = scalar_lea.vmem %s1, %s211
        %s213 = smul.u32 2, %s29
        %s214 = smul.u32 2, %s29
        %s215 = smul.u32 2, %s29
        %p216 = scmp.lt.s32.totalorder %s215, 3
        %s217 = scalar_select %p216, %s215, 3
        %s218 = smul.addr %s217, 8
        %s219 = scalar_lea.vmem %s4, %s218
        %s220 = smul.u32 2, %s29
        %s221 = smul.u32 %s29, 2
        %p222 = scmp.eq.s32.totalorder %s30, 0
        // Predicated region
        $region29: #{tpu_custom_call.1} parent=27 // pred_check
          %p223 = pneg %p222
        $region30: #{tpu_custom_call.1} parent=27 // pred_check_branch
          %225 = sbr.rel (%p223) target = $region32
        $region31: #{tpu_custom_call.1} parent=27 // pred_region
          %vm226 = vcmask 7168
          %227 = vst.msk [vmem:[#allocation2] sm:$0xff] %vm226, 0.0
          %228 = vst.msk [vmem:[#allocation2 + $0x8] sm:$0xff] %vm226, 0.0
        $region32: #{tpu_custom_call.1} parent=27 // pred_fallthru
          _
        %v229 = vld [vmem:[%s2] sm:$0xff]
        %v230 = vld [vmem:[%s2 + $0x8] sm:$0xff]
        %v231 = vld [vmem:[%s2 + $0x10] sm:$0xff]
        %v232 = vld [vmem:[%s2 + $0x18] sm:$0xff]
        loop: start=0, step=1, limit=2
        $region33: #{tpu_custom_call.1} parent=27 // loop_pre_header
          _
        $region34: #{tpu_custom_call.1} parent=27 // loop_header
          %s234 = sphi 0, %s238
          %p235 = scmp.ge.s32.totalorder %s234, 2
        $region35: #{tpu_custom_call.1} parent=27 // loop_header_branch
          %237 = sbr.rel (%p235) target = $region39
        $region36: #{tpu_custom_call.1} parent=27 // loop_body
          %s239 = smul.u32 %s234, 32
          %s240 = scalar_lea.vmem %s212, %s239
          %v241 = vld [vmem:[%s240] sm:$0xff]
          %v242 = vld [vmem:[%s240 + $0x8] sm:$0xff]
          %v243 = vld [vmem:[%s240 + $0x10] sm:$0xff]
          %v244 = vld [vmem:[%s240 + $0x18] sm:$0xff]
          %245 = vxpose.xlu0.b32.start [1/16] %v229, 128
          %246 = vxpose.xlu0.b32.cont [2/16] %v230, 128
          %247 = vxpose.xlu0.b32.cont [3/16] %v231, 128
          %248 = vxpose.xlu0.b32.cont [4/16] %v232, 128
          %249 = vxpose.xlu0.b32.cont [5/16] 0.0, 128
          %250 = vxpose.xlu0.b32.cont [6/16] 0.0, 128
          %251 = vxpose.xlu0.b32.cont [7/16] 0.0, 128
          %252 = vxpose.xlu0.b32.cont [8/16] 0.0, 128
          %253 = vxpose.xlu0.b32.cont [9/16] 0.0, 128
          %254 = vxpose.xlu0.b32.cont [10/16] 0.0, 128
          %255 = vxpose.xlu0.b32.cont [11/16] 0.0, 128
          %256 = vxpose.xlu0.b32.cont [12/16] 0.0, 128
          %257 = vxpose.xlu0.b32.cont [13/16] 0.0, 128
          %258 = vxpose.xlu0.b32.cont [14/16] 0.0, 128
          %259 = vxpose.xlu0.b32.cont [15/16] 0.0, 128
          %260 = vxpose.xlu0.b32.end [16/16] 0.0, 128
          %v261 = vpop.trf.xlu0
          %v262 = vpop.trf.xlu0
          %v263 = vpop.trf.xlu0
          %v264 = vpop.trf.xlu0
          %v265 = vpop.trf.xlu0
          %v266 = vpop.trf.xlu0
          %v267 = vpop.trf.xlu0
          %v268 = vpop.trf.xlu0
          %v269 = vpop.trf.xlu0
          %v270 = vpop.trf.xlu0
          %v271 = vpop.trf.xlu0
          %v272 = vpop.trf.xlu0
          %v273 = vpop.trf.xlu0
          %v274 = vpop.trf.xlu0
          %v275 = vpop.trf.xlu0
          %v276 = vpop.trf.xlu0
          %vm277 = vcmask 261120
          %v279 = vsel %vm277, %v261, 0
          %v282 = vsel %vm277, %v262, 0
          %284 = vmatprep.subr.mxu0 0.0
          %285 = vmatpush1.msra.mxu0 %v241
          %286 = vmatprep.subr.mxu0 0.0
          %287 = vmatpush1.msra.mxu0 %v242
          %288 = vmatprep.subr.mxu0 0.0
          %289 = vmatpush1.msra.mxu0 %v243
          %290 = vmatprep.subr.mxu0 0.0
          %291 = vmatpush1.msra.mxu0 %v244
          %292 = vmatprep.subr.mxu0 0.0
          %293 = vmatpush1.msra.mxu0 0.0
          %294 = vmatprep.subr.mxu0 0.0
          %295 = vmatpush1.msra.mxu0 0.0
          %296 = vmatprep.subr.mxu0 0.0
          %297 = vmatpush1.msra.mxu0 0.0
          %298 = vmatprep.subr.mxu0 0.0
          %299 = vmatpush1.msra.mxu0 0.0
          %300 = vmatprep.subr.mxu0 0.0
          %301 = vmatpush1.msra.mxu0 0.0
          %302 = vmatprep.subr.mxu0 0.0
          %303 = vmatpush1.msra.mxu0 0.0
          %304 = vmatprep.subr.mxu0 0.0
          %305 = vmatpush1.msra.mxu0 0.0
          %306 = vmatprep.subr.mxu0 0.0
          %307 = vmatpush1.msra.mxu0 0.0
          %308 = vmatprep.subr.mxu0 0.0
          %309 = vmatpush1.msra.mxu0 0.0
          %310 = vmatprep.subr.mxu0 0.0
          %311 = vmatpush1.msra.mxu0 0.0
          %312 = vmatprep.subr.mxu0 0.0
          %313 = vmatpush1.msra.mxu0 0.0
          %314 = vmatprep.subr.mxu0 0.0
          %315 = vmatpush1.msra.mxu0 0.0
          %316 = vmatprep.subr.mxu0 0.0
          %317 = vmatpush1.msra.mxu0 0.0
          %318 = vmatprep.subr.mxu0 0.0
          %319 = vmatpush1.msra.mxu0 0.0
          %320 = vmatprep.subr.mxu0 0.0
          %321 = vmatpush1.msra.mxu0 0.0
          %322 = vmatprep.subr.mxu0 0.0
          %323 = vmatpush1.msra.mxu0 0.0
          %324 = vmatprep.subr.mxu0 0.0
          %325 = vmatpush1.msra.mxu0 0.0
          %326 = vmatprep.subr.mxu0 0.0
          %327 = vmatpush1.msra.mxu0 0.0
          %328 = vmatprep.subr.mxu0 0.0
          %329 = vmatpush1.msra.mxu0 0.0
          %330 = vmatprep.subr.mxu0 0.0
          %331 = vmatpush1.msra.mxu0 0.0
          %332 = vmatprep.subr.mxu0 0.0
          %333 = vmatpush1.msra.mxu0 0.0
          %334 = vmatprep.subr.mxu0 0.0
          %335 = vmatpush1.msra.mxu0 0.0
          %336 = vmatprep.subr.mxu0 0.0
          %337 = vmatpush1.msra.mxu0 0.0
          %338 = vmatprep.subr.mxu0 0.0
          %339 = vmatpush1.msra.mxu0 0.0
          %340 = vmatprep.subr.mxu0 0.0
          %341 = vmatpush1.msra.mxu0 0.0
          %342 = vmatprep.subr.mxu0 0.0
          %343 = vmatpush1.msra.mxu0 0.0
          %344 = vmatprep.subr.mxu0 0.0
          %345 = vmatpush1.msra.mxu0 0.0
          %346 = vmatprep.subr.mxu0 0.0
          %347 = vmatpush1.msra.mxu0 0.0
          %348 = vmatprep.mubr.f32.mxu0 0.0
          %349 = vmatmul.mubr.f32.gmra.mrb[0].mxu0 %v279
          %v350 = vpop.f32.mrb[0].mxu0
          %v351 = vadd.f32 0.0, %v350
          %v352 = vpop.f32.mrb[0].mxu0
          %353 = vmatprep.mubr.f32.mxu0 0.0
          %354 = vmatmul.mubr.f32.gmra.mrb[0].mxu0 %v282
          %v355 = vpop.f32.mrb[0].mxu0
          %v356 = vadd.f32 0.0, %v355
          %v357 = vpop.f32.mrb[0].mxu0
          %358 = vdwg.mxu0
          %s359 = smul.u32 %s234, 8
          %s360 = scalar_lea.vmem [#allocation2], %s359
          %v361 = vld [vmem:[%s360] sm:$0xff]
          %vm362 = vcmask 7168
          %v363 = vsel %vm362, %v361, 0.0
          %vm364 = vcmask 64512
          %v365 = vsel %vm364, %v351, 0.0
          %v366 = vadd.f32 %v363, %v365
          %368 = vrot.lane.b32.xlu0 %v356, 1
          %v369 = vpop.permute.xlu0 %368
          %v371 = vsel %vm362, 0.0, %v369
          %v372 = vadd.f32 %v366, %v371
          %s373 = sadd.s32 %s221, %s234
          %s374 = sld [smem:[#allocation4 + %s373]]
          %v375 = vstv %s374
          %v376 = vmul.f32 %v372, %v375
          %s377 = scalar_lea.vmem %s196, %s359 [#allocation5]
          %378 = vst.msk [vmem:[%s377] sm:$0xff] %vm364, %v376
          %380 = vrot.lane.b32.xlu0 %v372, 120
          %v381 = vpop.permute.xlu0 %380
          %383 = vst.msk [vmem:[%s360] sm:$0xff] %vm362, %v381
          %385 = vrot.lane.b32.xlu0 %v376, 120
          %v386 = vpop.permute.xlu0 %385
          %s388 = scalar_lea.vmem %s219, %s359
          %389 = vst.msk [vmem:[%s388] sm:$0xff] %vm362, %v386
        $region37: #{tpu_custom_call.1} parent=27 // loop_footer
          %s238 = sadd.s32 1, %s234
        $region38: #{tpu_custom_call.1} parent=27 // loop_footer_branch
          %233 = sbr.rel target = $region34
        $region39: #{tpu_custom_call.1} parent=27 // loop_exit
          _
        %s390 = sand.u32 %s96, 1
        %s391 = scalar_lea.sflag [#allocation6], %s390
        %s392 = sand.u32 %s96, 1
        %s393 = smul.addr %s392, 16
        %s394 = scalar_lea.vmem [#allocation5], %s393
        %s395 = smul.u32 2, %s29
        %p396 = scmp.lt.s32.totalorder %s395, 3
        %s397 = scalar_select %p396, %s395, 3
        %s398 = smul.addr %s397, 8
        %s399 = scalar_lea.vmem %s4, %s398
        // Predicated region
        $region40: #{tpu_custom_call.1} parent=27 // pred_check
          %p400 = pneg %p106
        $region41: #{tpu_custom_call.1} parent=27 // pred_check_branch
          %402 = sbr.rel (%p400) target = $region43
        $region42: #{tpu_custom_call.1} parent=27 // pred_region
          %s403 = smul.u32 2, %s29
          %s405 = ssub.s32 256, 256
          %406 = vsyncadd %s391, %s405
          %s407 = sadd.s32 %s30, %s403
          %s408 = smul.addr %s407, 128
          %s409 = scalar_lea.hbm %s3, %s408
          %s410 = sshll.u32 %s394, 4
          %s411 = int_to_ptr.vmem [resolvable:$true] %s410
          %416 = dma.vmem_to_hbm [thread:$0]  %s411, 256, %s409, %s391, 128, 128, 8
        $region43: #{tpu_custom_call.1} parent=27 // pred_fallthru
          _
        // Predicated region
        $region44: #{tpu_custom_call.1} parent=27 // pred_check
          %p417 = pneg %p132
        $region45: #{tpu_custom_call.1} parent=27 // pred_check_branch
          %419 = sbr.rel (%p417) target = $region47
        $region46: #{tpu_custom_call.1} parent=27 // pred_region
          %s420 = smul.u32 2, %s29
        $region47: #{tpu_custom_call.1} parent=27 // pred_fallthru
          _
      $region28: #{tpu_custom_call.1} parent=5 // pred_fallthru
        _
      %p421 = scmp.le.s32.totalorder 2, %s20
      // Predicated region
      $region48: #{tpu_custom_call.1} parent=5 // pred_check
        %p422 = pneg %p421
      $region49: #{tpu_custom_call.1} parent=5 // pred_check_branch
        %424 = sbr.rel (%p422) target = $region51
      $region50: #{tpu_custom_call.1} parent=5 // pred_region
        %s425 = ssub.s32 %s20, 2
        // Predicated region
        $region52: #{tpu_custom_call.1} parent=50 // pred_check
          %p426 = pneg %p112
        $region53: #{tpu_custom_call.1} parent=50 // pred_check_branch
          %428 = sbr.rel (%p426) target = $region55
        $region54: #{tpu_custom_call.1} parent=50 // pred_region
          %s429 = sand.u32 %s97, 1
          %s430 = scalar_lea.sflag [#allocation6], %s429
          %s431 = sand.u32 %s97, 1
          %s432 = smul.addr %s431, 16
          %s433 = scalar_lea.vmem [#allocation5], %s432
          %434 = dma.done %s430, 256
        $region55: #{tpu_custom_call.1} parent=50 // pred_fallthru
          _
        // Predicated region
        $region56: #{tpu_custom_call.1} parent=50 // pred_check
          %p435 = pneg %p138
        $region57: #{tpu_custom_call.1} parent=50 // pred_check_branch
          %437 = sbr.rel (%p435) target = $region59
        $region58: #{tpu_custom_call.1} parent=50 // pred_region
          %s438 = smul.u32 2, %s31
          %p439 = scmp.lt.s32.totalorder %s438, 3
          %s440 = scalar_select %p439, %s438, 3
          %s441 = smul.addr %s440, 8
          %s442 = scalar_lea.vmem %s4, %s441
        $region59: #{tpu_custom_call.1} parent=50 // pred_fallthru
          _
      $region51: #{tpu_custom_call.1} parent=5 // pred_fallthru
        _
    $region6: #{tpu_custom_call.1} parent=1 // loop_footer
      %s24 = sadd.s32 1, %s20
    $region7: #{tpu_custom_call.1} parent=1 // loop_footer_branch
      %19 = sbr.rel target = $region3
    $region8: #{tpu_custom_call.1} parent=1 // loop_exit
      _
    %443 = vsyncpa [#allocation6], 1
    %s444 = scalar_lea.sflag [#allocation6], 1
    %445 = vsyncpa %s444, 1

</llo_original>
